<compile_context>
chip_gen: v5e
topology: v5e:2x2
jax: 0.10.0
libtpu: 0.0.40
codegen_flags: <defaults>
</compile_context>

<pallas_src>
import functools

import jax
import jax.numpy as jnp
from jax.experimental import pallas as pl
from jax.experimental.pallas import tpu as pltpu


def _linear_kernel(x_ref, w_ref, b_ref, o_ref):
    # One batch tile: MXU matmul (f32 accumulate) + broadcast bias add (VPU).
    acc = jnp.dot(x_ref[...], w_ref[...], preferred_element_type=jnp.float32)
    o_ref[...] = (acc + b_ref[...]).astype(o_ref.dtype)


def _round_up(v, m):
    return ((v + m - 1) // m) * m


@functools.partial(jax.jit, static_argnames=("tile_b", "xla_small_batch"))
def logistic_regression_forward(x, w_t, b, *, tile_b=8192, xla_small_batch=0):
    """out = x @ w_t + b   (== nn.Linear(input_dim, output_dim)(x))

    x   : [B, input_dim]            float32
    w_t : [input_dim, output_dim]   float32  (transpose of the PyTorch weight)
    b   : [output_dim]              float32
    tile_b          : max rows of x per batch tile (large default; mem-bound op).
    xla_small_batch : if B <= this, skip pallas_call and use a plain XLA dot
                      (launch overhead dwarfs the ~KBs of data at tiny B).
                      Default 0 (disabled) so the Pallas path is always exercised.
    """
    B, D_in = x.shape
    D_out = w_t.shape[1]
    out_dtype = x.dtype

    if B <= xla_small_batch:
        return x @ w_t + b

    # Lane-dense packing factor: fold `pack` batch rows into one 128-lane output
    # row whenever D_out divides 128 and B allows it exactly (reshapes stay
    # metadata-only). Otherwise fall back to the direct (B, D_out) layout.
    pack = 1
    if D_out < 128 and 128 % D_out == 0 and B % (128 // D_out) == 0:
        pack = 128 // D_out
    row_align = 8 * pack  # keeps x-block and out-block sublane-aligned

    # Batch tile: as large as tile_b allows (amortize per-step overhead), but keep
    # >=2 grid steps for large batches so v7x can shard across its 2 TensorCores.
    tb = _round_up(min(max(tile_b, row_align), _round_up(B, row_align)), row_align)
    n_steps = pl.cdiv(B, tb)
    if n_steps == 1 and B >= 2048:
        tb = _round_up(pl.cdiv(B, 2), row_align)
        n_steps = pl.cdiv(B, tb)

    if pack > 1:
        # Row-packed formulation: x2[r] holds batch rows pack*r .. pack*r+pack-1
        # concatenated; w_blk = kron(I_pack, w_t) makes x2 @ w_blk reproduce the
        # same outputs, laid out lane-dense as (B/pack, pack*D_out).
        x_in = x.reshape(B // pack, pack * D_in)                 # metadata-only
        w_in = jnp.kron(jnp.eye(pack, dtype=w_t.dtype), w_t)     # (pack*D_in, 128)
        b_in = jnp.tile(b.astype(jnp.float32), pack).reshape(1, pack * D_out)
        x_block = (tb // pack, pack * D_in)
        out_rows, out_cols = B // pack, pack * D_out
        out_block = (tb // pack, out_cols)
    else:
        x_in = x
        w_in = w_t
        b_in = b.reshape(1, D_out).astype(jnp.float32)
        x_block = (tb, D_in)
        out_rows, out_cols = B, D_out
        out_block = (tb, D_out)

    cost = pl.CostEstimate(
        flops=2 * (B // pack if pack > 1 else B) * (pack * D_in) * (pack * D_out),
        transcendentals=0,
        bytes_accessed=(B * D_in * 4                     # streamed activations
                        + (pack * D_in) * (pack * D_out) * 4   # resident weight
                        + pack * D_out * 4                     # resident bias
                        + B * D_out * 4),                      # streamed output
    )

    out = pl.pallas_call(
        _linear_kernel,
        out_shape=jax.ShapeDtypeStruct((out_rows, out_cols), out_dtype),
        grid=(n_steps,),
        in_specs=[
            pl.BlockSpec(x_block, lambda i: (i, 0)),              # streamed x tile
            pl.BlockSpec(w_in.shape, lambda i: (0, 0)),           # resident weight
            pl.BlockSpec((1, out_cols), lambda i: (0, 0)),        # resident bias
        ],
        out_specs=pl.BlockSpec(out_block, lambda i: (i, 0)),
        compiler_params=pltpu.CompilerParams(
            dimension_semantics=("parallel",),
        ),
        cost_estimate=cost,
    )(x_in, w_in, b_in)

    if pack > 1:
        out = out.reshape(B, D_out)   # metadata-only (row-major)
    return out


if __name__ == "__main__":
    # Small shapes implied by the module: batch=8, input_dim=32, output_dim=16.
    batch, input_dim, output_dim = 8, 32, 16

    key = jax.random.PRNGKey(0)
    kx, kw, kb = jax.random.split(key, 3)

    x = jax.random.normal(kx, (batch, input_dim), dtype=jnp.float32)

    # Deterministic params mirroring nn.Linear's U(-1/sqrt(in), 1/sqrt(in)) init.
    bound = 1.0 / (input_dim ** 0.5)
    w = jax.random.uniform(kw, (output_dim, input_dim),
                           minval=-bound, maxval=bound, dtype=jnp.float32)
    b = jax.random.uniform(kb, (output_dim,),
                           minval=-bound, maxval=bound, dtype=jnp.float32)

    out = logistic_regression_forward(x, w.T, b)
    out = jax.block_until_ready(out)
    ref = x @ w.T + b
    assert out.shape == (batch, output_dim)
    assert jnp.allclose(out, ref, atol=1e-5, rtol=1e-5)

    # Multi-step, ragged-last-block, lane-dense path (B=1000 divisible by 8,
    # not divisible by the 256-row tile).
    xb = jax.random.normal(kx, (1000, input_dim), dtype=jnp.float32)
    out_big = jax.block_until_ready(
        logistic_regression_forward(xb, w.T, b, tile_b=256))
    assert out_big.shape == (1000, output_dim)
    assert jnp.allclose(out_big, xb @ w.T + b, atol=1e-5, rtol=1e-5)

    # Large-batch path that splits one big tile into 2 parallel grid steps (v7x TCs).
    xl = jax.random.normal(kb, (4096, input_dim), dtype=jnp.float32)
    out_l = jax.block_until_ready(logistic_regression_forward(xl, w.T, b))
    assert out_l.shape == (4096, output_dim)
    assert jnp.allclose(out_l, xl @ w.T + b, atol=1e-5, rtol=1e-5)

    # Fallback (pack=1, masked narrow stores) path: batch not divisible by 8.
    xs = jax.random.normal(kw, (10, input_dim), dtype=jnp.float32)
    out_s = jax.block_until_ready(logistic_regression_forward(xs, w.T, b))
    assert out_s.shape == (10, output_dim)
    assert jnp.allclose(out_s, xs @ w.T + b, atol=1e-5, rtol=1e-5)

    print("KERNEL_OK")
</pallas_src>

<mosaic_0001>
module attributes {stable_mosaic.version = 11 : i64} {
  func.func @_linear_kernel(%arg0: i32, %arg1: memref<8x256xf32, #tpu.memory_space<vmem>>, %arg2: memref<256x128xf32, #tpu.memory_space<vmem>>, %arg3: memref<1x128xf32, #tpu.memory_space<vmem>>, %arg4: memref<8x128xf32, #tpu.memory_space<vmem>>) attributes {dimension_semantics = [#tpu.dimension_semantics<parallel>], iteration_bounds = array<i64: 1>, scalar_prefetch = 0 : i64, scratch_operands = 0 : i64, tpu.core_type = #tpu.core_type<tc>, window_params = [{transform_indices = @transform_0, window_bounds = array<i64: 8, 256>}, {pipeline_mode = #tpu.pipeline_mode<synchronous>, transform_indices = @transform_1, window_bounds = array<i64: 256, 128>}, {pipeline_mode = #tpu.pipeline_mode<synchronous>, transform_indices = @transform_2, window_bounds = array<i64: 1, 128>}, {transform_indices = @transform_3, window_bounds = array<i64: 8, 128>}]} {
    %c0 = arith.constant 0 : index
    %c0_0 = arith.constant 0 : index
    %0 = vector.load %arg1[%c0, %c0_0] : memref<8x256xf32, #tpu.memory_space<vmem>>, vector<8x256xf32>
    %c0_1 = arith.constant 0 : index
    %c0_2 = arith.constant 0 : index
    %1 = vector.load %arg2[%c0_1, %c0_2] : memref<256x128xf32, #tpu.memory_space<vmem>>, vector<256x128xf32>
    %cst = arith.constant dense<0.000000e+00> : vector<8x128xf32>
    %2 = tpu.matmul %0, %1, %cst {dimension_numbers = #tpu.dot_dimension_numbers<[1], [0], [0], [1], [0, 0, 1, 1], [], []>} : vector<8x256xf32>, vector<256x128xf32>, vector<8x128xf32> -> vector<8x128xf32>
    %c0_3 = arith.constant 0 : index
    %c0_4 = arith.constant 0 : index
    %3 = vector.load %arg3[%c0_3, %c0_4] : memref<1x128xf32, #tpu.memory_space<vmem>>, vector<1x128xf32>
    %4 = vector.broadcast %3 : vector<1x128xf32> to vector<8x128xf32>
    %5 = arith.addf %2, %4 : vector<8x128xf32>
    %c0_5 = arith.constant 0 : index
    %c0_6 = arith.constant 0 : index
    %6 = vector.load %arg4[%c0_5, %c0_6] : memref<8x128xf32, #tpu.memory_space<vmem>>, vector<8x128xf32>
    tpu.vector_store %arg4[%c0_5, %c0_6], %5 {strides = array<i32>} : memref<8x128xf32, #tpu.memory_space<vmem>>, vector<8x128xf32>,
    return
  }
  func.func @transform_0(%arg0: i32) -> (i32, i32) {
    %c0_i32 = arith.constant 0 : i32
    %c0_i32_0 = arith.constant 0 : i32
    return %arg0, %c0_i32 : i32, i32
  }
  func.func @transform_1(%arg0: i32) -> (i32, i32) {
    %c0_i32 = arith.constant 0 : i32
    %c0_i32_0 = arith.constant 0 : i32
    %c0_i32_1 = arith.constant 0 : i32
    return %c0_i32, %c0_i32_0 : i32, i32
  }
  func.func @transform_2(%arg0: i32) -> (i32, i32) {
    %c0_i32 = arith.constant 0 : i32
    %c0_i32_0 = arith.constant 0 : i32
    %c0_i32_1 = arith.constant 0 : i32
    return %c0_i32, %c0_i32_0 : i32, i32
  }
  func.func @transform_3(%arg0: i32) -> (i32, i32) {
    %c0_i32 = arith.constant 0 : i32
    %c0_i32_0 = arith.constant 0 : i32
    return %arg0, %c0_i32 : i32, i32
  }
}

</mosaic_0001>

<llo_original>
// kernel: tile.8
$region0: #{tile.8}
  #allocation0 [shape = 's32[1]{0}', space=sflag, size = 0x4, scoped, tag = 'scoped memory for tile.8']
  %s0 = inlined_call_operand.vmem [shape: f32[16], index: 0, kind: input, shape index: {}]
  %s1 = inlined_call_operand.vmem [shape: f32[8,16], index: 1, kind: output, shape index: {}]
  // Predicated region
  $region2: #{tile.8} parent=0 // pred_check
    _
  $region3: #{tile.8} parent=0 // pred_check_branch
    %3 = sbr.rel (0) target = $region5
  $region4: #{tile.8} parent=0 // pred_region
    _
  $region5: #{tile.8} parent=0 // pred_fallthru
    _
  %v4 = vld [vmem:[%s0] ss:$0 sm:$0xff]
  %5 = vst [vmem:[%s1] sm:$0xff] %v4

// kernel: tile.9
$region0: #{tile.9}
  %s0 = inlined_call_operand.vmem [shape: f32[8,16], index: 0, kind: input, shape index: {}]
  %s1 = inlined_call_operand.vmem [shape: f32[1,128], index: 1, kind: output, shape index: {}]
  $region1: #{tile.9} parent=0
    #allocation0 [shape = 'u8[4096]{0}', space=vmem, size = 0x1000, scoped, tag = 'scoped mem for output reshape']
    %v2 = vld [vmem:[%s0] sm:$0x1]
    %vm3 = vcmask 130048
    %4 = vst.msk [vmem:[#allocation0] sm:$0x1] %vm3, %v2
    %s5 = scalar_lea.vmem %s0, 7
    %v6 = vld [vmem:[%s5] sm:$0x1]
    %7 = vrot.lane.b32.xlu0 %v6, 112
    %v8 = vpop.permute.xlu0 %7
    %vm9 = vcmask 1048448
    %10 = vst.msk [vmem:[#allocation0] sm:$0x1] %vm9, %v8
    %s11 = scalar_lea.vmem %s0, 6
    %v12 = vld [vmem:[%s11] sm:$0x1]
    %13 = vrot.lane.b32.xlu0 %v12, 96
    %v14 = vpop.permute.xlu0 %13
    %vm15 = vcmask 917248
    %16 = vst.msk [vmem:[#allocation0] sm:$0x1] %vm15, %v14
    %s17 = scalar_lea.vmem %s0, 5
    %v18 = vld [vmem:[%s17] sm:$0x1]
    %19 = vrot.lane.b32.xlu0 %v18, 80
    %v20 = vpop.permute.xlu0 %19
    %vm21 = vcmask 786048
    %22 = vst.msk [vmem:[#allocation0] sm:$0x1] %vm21, %v20
    %s23 = scalar_lea.vmem %s0, 4
    %v24 = vld [vmem:[%s23] sm:$0x1]
    %25 = vrot.lane.b32.xlu0 %v24, 64
    %v26 = vpop.permute.xlu0 %25
    %vm27 = vcmask 654848
    %28 = vst.msk [vmem:[#allocation0] sm:$0x1] %vm27, %v26
    %s29 = scalar_lea.vmem %s0, 3
    %v30 = vld [vmem:[%s29] sm:$0x1]
    %31 = vrot.lane.b32.xlu0 %v30, 48
    %v32 = vpop.permute.xlu0 %31
    %vm33 = vcmask 523648
    %34 = vst.msk [vmem:[#allocation0] sm:$0x1] %vm33, %v32
    %s35 = scalar_lea.vmem %s0, 2
    %v36 = vld [vmem:[%s35] sm:$0x1]
    %37 = vrot.lane.b32.xlu0 %v36, 32
    %v38 = vpop.permute.xlu0 %37
    %vm39 = vcmask 392448
    %40 = vst.msk [vmem:[#allocation0] sm:$0x1] %vm39, %v38
    %s41 = scalar_lea.vmem %s0, 1
    %v42 = vld [vmem:[%s41] sm:$0x1]
    %43 = vrot.lane.b32.xlu0 %v42, 16
    %v44 = vpop.permute.xlu0 %43
    %vm45 = vcmask 261248
    %46 = vst.msk [vmem:[#allocation0] sm:$0x1] %vm45, %v44
    %s48 = ssub.s32 2, 1
    %v49 = vld [vmem:[#allocation0] sm:%s48]
    %s51 = ssub.s32 2, 1
    %52 = vst [vmem:[%s1] sm:%s51] %v49

// kernel: logistic_regression_forward.1
$region0: #{logistic_regression_forward.1}
  #allocation0 [shape = 'u32[]', space=smem, size = 0x4, offset = 0x4, fixed_abs, tag = 'smem constant byte address 0x4 - core index']
  #allocation1 [shape = 'u32[72,128]{1,0:T(1,128)}', space=vmem, size = 0x9000, scoped, tag = 'internal scratch']
  %s0 = inlined_call_operand.vmem [shape: f32[1,256], index: 0, kind: input, shape index: {}]
  %s1 = inlined_call_operand.vmem [shape: f32[256,128], index: 1, kind: input, shape index: {}]
  %s2 = inlined_call_operand.vmem [shape: f32[1,128], index: 2, kind: input, shape index: {}]
  %s3 = inlined_call_operand.vmem [shape: f32[1,128], index: 3, kind: output, shape index: {}]
  %s4 = sld [smem:[#allocation0]]
  $region52: #{logistic_regression_forward.1} parent=0
    _
  %s6 = ssub.s32 1, %s4
  %s7 = scalar_select 0, %s6, %s4
  $region1: #{logistic_regression_forward.1} parent=0
    #allocation2 [shape = 'u8[4096]{0}', space=vmem, size = 0x1000, scoped, tag = 'output window, operand 0, single buffered']
    // Predicated region
    $region2: #{logistic_regression_forward.1} parent=1 // pred_check
      _
    $region3: #{logistic_regression_forward.1} parent=1 // pred_check_branch
      %9 = sbr.rel (0) target = $region5
    $region4: #{logistic_regression_forward.1} parent=1 // pred_region
      _
    $region5: #{logistic_regression_forward.1} parent=1 // pred_fallthru
      _
    // Predicated region
    $region6: #{logistic_regression_forward.1} parent=1 // pred_check
      _
    $region7: #{logistic_regression_forward.1} parent=1 // pred_check_branch
      %11 = sbr.rel (0) target = $region9
    $region8: #{logistic_regression_forward.1} parent=1 // pred_region
      _
    $region9: #{logistic_regression_forward.1} parent=1 // pred_fallthru
      _
    // Predicated region
    $region10: #{logistic_regression_forward.1} parent=1 // pred_check
      _
    $region11: #{logistic_regression_forward.1} parent=1 // pred_check_branch
      %13 = sbr.rel (0) target = $region13
    $region12: #{logistic_regression_forward.1} parent=1 // pred_region
      _
    $region13: #{logistic_regression_forward.1} parent=1 // pred_fallthru
      _
    %v14 = vld [vmem:[%s0] sm:$0x3]
    %v15 = vld [vmem:[%s0 + $0x2] sm:$0x3]
    %v16 = vld [vmem:[%s0 + $0x4] sm:$0x3]
    %v17 = vld [vmem:[%s0 + $0x6] sm:$0x3]
    %v18 = vld [vmem:[%s0 + $0x8] sm:$0x3]
    %v19 = vld [vmem:[%s0 + $0xa] sm:$0x3]
    %v20 = vld [vmem:[%s0 + $0xc] sm:$0x3]
    %v21 = vld [vmem:[%s0 + $0xe] sm:$0x3]
    %v22 = vld [vmem:[%s1] sm:$0xff]
    %v23 = vld [vmem:[%s1 + $0x8] sm:$0xff]
    %v24 = vld [vmem:[%s1 + $0x10] sm:$0xff]
    %v25 = vld [vmem:[%s1 + $0x18] sm:$0xff]
    %v26 = vld [vmem:[%s1 + $0x20] sm:$0xff]
    %v27 = vld [vmem:[%s1 + $0x28] sm:$0xff]
    %v28 = vld [vmem:[%s1 + $0x30] sm:$0xff]
    %v29 = vld [vmem:[%s1 + $0x38] sm:$0xff]
    %v30 = vld [vmem:[%s1 + $0x40] sm:$0xff]
    %v31 = vld [vmem:[%s1 + $0x48] sm:$0xff]
    %v32 = vld [vmem:[%s1 + $0x50] sm:$0xff]
    %v33 = vld [vmem:[%s1 + $0x58] sm:$0xff]
    %v34 = vld [vmem:[%s1 + $0x60] sm:$0xff]
    %v35 = vld [vmem:[%s1 + $0x68] sm:$0xff]
    %v36 = vld [vmem:[%s1 + $0x70] sm:$0xff]
    %v37 = vld [vmem:[%s1 + $0x78] sm:$0xff]
    %v38 = vld [vmem:[%s1 + $0x80] sm:$0xff]
    %v39 = vld [vmem:[%s1 + $0x88] sm:$0xff]
    %v40 = vld [vmem:[%s1 + $0x90] sm:$0xff]
    %v41 = vld [vmem:[%s1 + $0x98] sm:$0xff]
    %v42 = vld [vmem:[%s1 + $0xa0] sm:$0xff]
    %v43 = vld [vmem:[%s1 + $0xa8] sm:$0xff]
    %v44 = vld [vmem:[%s1 + $0xb0] sm:$0xff]
    %v45 = vld [vmem:[%s1 + $0xb8] sm:$0xff]
    %v46 = vld [vmem:[%s1 + $0xc0] sm:$0xff]
    %v47 = vld [vmem:[%s1 + $0xc8] sm:$0xff]
    %v48 = vld [vmem:[%s1 + $0xd0] sm:$0xff]
    %v49 = vld [vmem:[%s1 + $0xd8] sm:$0xff]
    %v50 = vld [vmem:[%s1 + $0xe0] sm:$0xff]
    %v51 = vld [vmem:[%s1 + $0xe8] sm:$0xff]
    %v52 = vld [vmem:[%s1 + $0xf0] sm:$0xff]
    %v53 = vld [vmem:[%s1 + $0xf8] sm:$0xff]
    %v54 = vld [vmem:[%s2] sm:$0x1]
    %v56 = vperm.slane %v54, 0
    %66 = vst [vmem:[#allocation1] ss:$9 sm:$0xff] %v14
    %s67 = scalar_lea.vmem [#allocation1], 1
    %68 = vst [vmem:[%s67] ss:$9 sm:$0xff] %v15
    %s69 = scalar_lea.vmem [#allocation1], 2
    %70 = vst [vmem:[%s69] ss:$9 sm:$0xff] %v16
    %s71 = scalar_lea.vmem [#allocation1], 3
    %72 = vst [vmem:[%s71] ss:$9 sm:$0xff] %v17
    %s73 = scalar_lea.vmem [#allocation1], 4
    %74 = vst [vmem:[%s73] ss:$9 sm:$0xff] %v18
    %s75 = scalar_lea.vmem [#allocation1], 5
    %76 = vst [vmem:[%s75] ss:$9 sm:$0xff] %v19
    %s77 = scalar_lea.vmem [#allocation1], 6
    %78 = vst [vmem:[%s77] ss:$9 sm:$0xff] %v20
    %s79 = scalar_lea.vmem [#allocation1], 7
    %80 = vst [vmem:[%s79] ss:$9 sm:$0xff] %v21
    %v81 = vld [vmem:[#allocation1] sm:$0xff]
    %v82 = vld [vmem:[#allocation1 + $0x9] sm:$0xff]
    %85 = vmatpush.msra.mxu0 %v37
    %86 = vmatpush.msra.mxu0 %v36
    %87 = vmatpush.msra.mxu0 %v35
    %88 = vmatpush.msra.mxu0 %v34
    %89 = vmatpush.msra.mxu0 %v33
    %90 = vmatpush.msra.mxu0 %v32
    %91 = vmatpush.msra.mxu0 %v31
    %92 = vmatpush.msra.mxu0 %v30
    %93 = vmatpush.msra.mxu0 %v29
    %94 = vmatpush.msra.mxu0 %v28
    %95 = vmatpush.msra.mxu0 %v27
    %96 = vmatpush.msra.mxu0 %v26
    %97 = vmatpush.msra.mxu0 %v25
    %98 = vmatpush.msra.mxu0 %v24
    %99 = vmatpush.msra.mxu0 %v23
    %100 = vmatpush.msra.mxu0 %v22
    %101 = vmatmul.f32.gmra.mxu0 %v81
    %v102 = vpop.f32.mrf.mxu0
    %v103 = vadd.f32 %v56, %v102
    %104 = vdwg.mxu0
    %105 = vmatpush.msra.mxu0 %v53
    %106 = vmatpush.msra.mxu0 %v52
    %107 = vmatpush.msra.mxu0 %v51
    %108 = vmatpush.msra.mxu0 %v50
    %109 = vmatpush.msra.mxu0 %v49
    %110 = vmatpush.msra.mxu0 %v48
    %111 = vmatpush.msra.mxu0 %v47
    %112 = vmatpush.msra.mxu0 %v46
    %113 = vmatpush.msra.mxu0 %v45
    %114 = vmatpush.msra.mxu0 %v44
    %115 = vmatpush.msra.mxu0 %v43
    %116 = vmatpush.msra.mxu0 %v42
    %117 = vmatpush.msra.mxu0 %v41
    %118 = vmatpush.msra.mxu0 %v40
    %119 = vmatpush.msra.mxu0 %v39
    %120 = vmatpush.msra.mxu0 %v38
    %121 = vmatmul.f32.gmra.mxu0 %v82
    %v122 = vpop.f32.mrf.mxu0
    %v123 = vadd.f32 %v103, %v122
    %124 = vdwg.mxu0
    %125 = vst [vmem:[#allocation2] sm:$0xff] %v123
    // Predicated region
    $region14: #{logistic_regression_forward.1} parent=1 // pred_check
      _
    $region15: #{logistic_regression_forward.1} parent=1 // pred_check_branch
      %127 = sbr.rel (0) target = $region17
    $region16: #{logistic_regression_forward.1} parent=1 // pred_region
      // Predicated region
      $region18: #{logistic_regression_forward.1} parent=16 // pred_check
        _
      $region19: #{logistic_regression_forward.1} parent=16 // pred_check_branch
        %129 = sbr.rel (0) target = $region21
      $region20: #{logistic_regression_forward.1} parent=16 // pred_region
        // Predicated region
        $region22: #{logistic_regression_forward.1} parent=20 // pred_check
          _
        $region23: #{logistic_regression_forward.1} parent=20 // pred_check_branch
          %131 = sbr.rel target = $region25
        $region24: #{logistic_regression_forward.1} parent=20 // pred_region
          // Predicated region
          $region37: #{logistic_regression_forward.1} parent=24 // pred_check
            _
          $region38: #{logistic_regression_forward.1} parent=24 // pred_check_branch
            %147 = sbr.rel (0) target = $region40
          $region39: #{logistic_regression_forward.1} parent=24 // pred_region
            %s149 = ssub.s32 2, 1
            loop: start=0, step=1, limit=1
            $region41: #{logistic_regression_forward.1} parent=39 // loop_pre_header
              _
            $region42: #{logistic_regression_forward.1} parent=39 // loop_header
              %s151 = sphi 0, %s155
              %p152 = scmp.ge.s32.totalorder %s151, 1
              %s156 = sphi [#allocation2], [#allocation2]
              %s157 = sphi %s3, %s3
            $region43: #{logistic_regression_forward.1} parent=39 // loop_header_branch
              %154 = sbr.rel (%p152) target = $region47
            $region44: #{logistic_regression_forward.1} parent=39 // loop_body
              %v158 = vld [vmem:[%s156] sm:%s149]
              %159 = vst [vmem:[%s157] sm:%s149] %v158
            $region45: #{logistic_regression_forward.1} parent=39 // loop_footer
              %s155 = sadd.s32 1, %s151
            $region46: #{logistic_regression_forward.1} parent=39 // loop_footer_branch
              %150 = sbr.rel target = $region42
            $region47: #{logistic_regression_forward.1} parent=39 // loop_exit
              _
          $region40: #{logistic_regression_forward.1} parent=24 // pred_fallthru
            _
        $region25: #{logistic_regression_forward.1} parent=20 // pred_fallthru
          _
        // Predicated region
        $region26: #{logistic_regression_forward.1} parent=20 // pred_check
          _
        $region27: #{logistic_regression_forward.1} parent=20 // pred_check_branch
          %133 = sbr.rel (0) target = $region29
        $region28: #{logistic_regression_forward.1} parent=20 // pred_region
          %s135 = ssub.s32 2, 1
          loop: start=0, step=1, limit=1
          $region30: #{logistic_regression_forward.1} parent=28 // loop_pre_header
            _
          $region31: #{logistic_regression_forward.1} parent=28 // loop_header
            %s137 = sphi 0, %s141
            %p138 = scmp.ge.s32.totalorder %s137, 1
            %s142 = sphi [#allocation2], [#allocation2]
            %s143 = sphi %s3, %s3
          $region32: #{logistic_regression_forward.1} parent=28 // loop_header_branch
            %140 = sbr.rel (%p138) target = $region36
          $region33: #{logistic_regression_forward.1} parent=28 // loop_body
            %v144 = vld [vmem:[%s142] sm:%s135]
            %145 = vst [vmem:[%s143] sm:%s135] %v144
          $region34: #{logistic_regression_forward.1} parent=28 // loop_footer
            %s141 = sadd.s32 1, %s137
          $region35: #{logistic_regression_forward.1} parent=28 // loop_footer_branch
            %136 = sbr.rel target = $region31
          $region36: #{logistic_regression_forward.1} parent=28 // loop_exit
            _
        $region29: #{logistic_regression_forward.1} parent=20 // pred_fallthru
          _
      $region21: #{logistic_regression_forward.1} parent=16 // pred_fallthru
        _
      %160 = vnop
    $region17: #{logistic_regression_forward.1} parent=1 // pred_fallthru
      _
    // Predicated region
    $region48: #{logistic_regression_forward.1} parent=1 // pred_check
      _
    $region49: #{logistic_regression_forward.1} parent=1 // pred_check_branch
      %162 = sbr.rel (0) target = $region51
    $region50: #{logistic_regression_forward.1} parent=1 // pred_region
      _
    $region51: #{logistic_regression_forward.1} parent=1 // pred_fallthru
      _

</llo_original>
